<compile_context>
chip_gen: v6e
topology: v6e:2x2x1
jax: 0.10.0
libtpu: 0.0.40
codegen_flags: <defaults>
</compile_context>

<pallas_src>
import math
import functools
import numpy as np

import jax
import jax.numpy as jnp
from jax import lax
from jax.experimental import pallas as pl
from jax.experimental.pallas import tpu as pltpu

LANE = 128                    # lane-dense padding target for class heads
NEG_BIG = -1e9                # bias for padded (non-existent) classes
VMEM_LIMIT = 48 * 1024 * 1024  # leaves headroom on v7x (64 MiB physical)

# bf16 MXU operands with f32 accumulation (~2-4x MXU throughput, same VLIW
# structure).  Set to jnp.float32 for exact f32 parity with PyTorch.
MATMUL_DTYPE = jnp.bfloat16


def _dot(a, b):
    """MXU matmul with operand cast + f32 accumulation."""
    return jnp.dot(a.astype(MATMUL_DTYPE), b.astype(MATMUL_DTYPE),
                   preferred_element_type=jnp.float32)


def _round_up(x, m):
    return ((x + m - 1) // m) * m


def _pick_row_block(np_rows, cap=256):
    m = np_rows // 8
    best = 1
    for d in range(1, min(m, cap // 8) + 1):
        if m % d == 0:
            best = d
    return 8 * best


# ---------------------------------------------------------------------------
# shared in-kernel helpers
# ---------------------------------------------------------------------------
def _masked_xent(logits, tgt, wgt, smoothing, n_real):
    """Masked CrossEntropy (reduction carried by wgt).  Padded classes have a
    -1e9 bias so they contribute exactly 0 probability."""
    m = jnp.max(logits, axis=-1, keepdims=True)
    lse = jnp.log(jnp.sum(jnp.exp(logits - m), axis=-1, keepdims=True)) + m
    logp = logits - lse
    cls = lax.broadcasted_iota(jnp.int32, logits.shape, 1)
    nll = -jnp.sum(jnp.where(cls == tgt, logp, 0.0), axis=-1, keepdims=True)
    if smoothing > 0.0:
        real = (cls < n_real).astype(jnp.float32)
        uni = -jnp.sum(logp * real, axis=-1, keepdims=True) * (1.0 / n_real)
        per = (1.0 - smoothing) * nll + smoothing * uni
    else:
        per = nll
    return jnp.sum(per * wgt, axis=0, keepdims=True)


def _argmax_lanes(logits):
    """First-occurrence argmax over the lane (class) axis -> (rows, 1) int32."""
    m = jnp.max(logits, axis=-1, keepdims=True)
    cls = lax.broadcasted_iota(jnp.float32, logits.shape, 1)
    big = jnp.float32(logits.shape[-1])
    idx = jnp.min(jnp.where(logits >= m, cls, big), axis=-1, keepdims=True)
    return idx.astype(jnp.int32)


# ---------------------------------------------------------------------------
# K1: SAGEConv(mean, normalize) + leaky_relu(0.2) + per-group mean pool,
#     row-tiled over a grid; pooled output is the accumulator.
# ---------------------------------------------------------------------------
def _sage_pool_kernel(x_ref, amean_ref, poolt_ref, wl_ref, bl_ref, wr_ref,
                      o_ref, *, rb):
    r = pl.program_id(0)

    @pl.when(r == 0)
    def _():
        o_ref[...] = jnp.zeros_like(o_ref)

    x = x_ref[...]                                        # full node features (resident)
    row = pl.multiple_of(r * rb, rb)
    x_blk = x_ref[pl.ds(row, rb), :]                      # this block's own rows
    agg = _dot(amean_ref[...], x)                         # mean-aggregated neighbours
    out = _dot(agg, wl_ref[...]) + bl_ref[...] + _dot(x_blk, wr_ref[...])
    # F.normalize(p=2, dim=-1): x / max(||x||, 1e-12)
    sq = jnp.sum(out * out, axis=-1, keepdims=True)
    out = out * lax.rsqrt(jnp.maximum(sq, 1e-24))
    out = jnp.where(out >= 0, out, 0.2 * out)             # leaky_relu(0.2)
    # accumulate fused per-sim-group mean pooling: pooled += pool[:, blk] @ out
    o_ref[...] += lax.dot_general(
        poolt_ref[...].astype(MATMUL_DTYPE), out.astype(MATMUL_DTYPE),
        (((0,), (0,)), ((), ())), preferred_element_type=jnp.float32)


def sage_pool(pd_emb_p, a_mean, pool_t, wl_t, bl, wr_t, *, row_block):
    Np = pd_emb_p.shape[0]
    S = pool_t.shape[1]
    SH = wl_t.shape[1]
    rb = row_block
    grid_spec = pltpu.PrefetchScalarGridSpec(
        num_scalar_prefetch=0,
        grid=(Np // rb,),
        in_specs=[
            pl.BlockSpec(pd_emb_p.shape, lambda r: (0, 0)),   # x (resident)
            pl.BlockSpec((rb, Np), lambda r: (r, 0)),          # adjacency row block
            pl.BlockSpec((rb, S), lambda r: (r, 0)),           # pool^T row block
            pl.BlockSpec(wl_t.shape, lambda r: (0, 0)),
            pl.BlockSpec(bl.shape, lambda r: (0, 0)),
            pl.BlockSpec(wr_t.shape, lambda r: (0, 0)),
        ],
        out_specs=pl.BlockSpec((S, SH), lambda r: (0, 0)),     # accumulator
    )
    return pl.pallas_call(
        functools.partial(_sage_pool_kernel, rb=rb),
        out_shape=jax.ShapeDtypeStruct((S, SH), jnp.float32),
        grid_spec=grid_spec,
        compiler_params=pltpu.CompilerParams(
            dimension_semantics=("arbitrary",), vmem_limit_bytes=VMEM_LIMIT),
    )(pd_emb_p, a_mean, pool_t, wl_t, bl, wr_t)


# ---------------------------------------------------------------------------
# K2: single-sequence GRU, input projection hoisted to a prologue matmul.
# ---------------------------------------------------------------------------
def _gru_seq_kernel(x_ref, wih_ref, bih_ref, whh_ref, bhh_ref, out_ref, gi_scr):
    H = whh_ref.shape[0]
    T = x_ref.shape[0]
    gi_scr[...] = _dot(x_ref[...], wih_ref[...]) + bih_ref[...]
    whh = whh_ref[...]
    bhh = bhh_ref[...]

    def step(t, h):
        gi = gi_scr[pl.ds(t, 1), :]                       # (1, 3H)
        gh = _dot(h, whh) + bhh
        r = jax.nn.sigmoid(gi[:, :H] + gh[:, :H])
        z = jax.nn.sigmoid(gi[:, H:2 * H] + gh[:, H:2 * H])
        n = jnp.tanh(gi[:, 2 * H:] + r * gh[:, 2 * H:])
        h = (1.0 - z) * n + z * h
        out_ref[pl.ds(t, 1), :] = h
        return h

    lax.fori_loop(0, T, step, jnp.zeros((1, H), jnp.float32))


def gru_encode(x_seq, wih_t, bih, whh_t, bhh):
    T = x_seq.shape[0]
    H = whh_t.shape[0]
    # TODO(synk): time-chunk this too for very long pieces (S in the thousands).
    return pl.pallas_call(
        _gru_seq_kernel,
        out_shape=jax.ShapeDtypeStruct((T, H), jnp.float32),
        scratch_shapes=[pltpu.VMEM((T, 3 * H), jnp.float32)],
        compiler_params=pltpu.CompilerParams(vmem_limit_bytes=VMEM_LIMIT),
    )(x_seq, wih_t, bih, whh_t, bhh)


# ---------------------------------------------------------------------------
# K3: multi-head self-attention weights (per-head, lane-contiguous weights).
# ---------------------------------------------------------------------------
def _attn_kernel(x_ref, wq_ref, bq_ref, wk_ref, bk_ref, o_ref, *, num_heads):
    x = x_ref[...]
    n = x.shape[0]
    dh = wq_ref.shape[2]
    scale = 1.0 / math.sqrt(dh)
    acc = jnp.zeros((n, n), jnp.float32)
    for h in range(num_heads):                            # small static unroll
        qh = _dot(x, wq_ref[h]) + bq_ref[h]               # (n, dh)
        kh = _dot(x, wk_ref[h]) + bk_ref[h]
        s = lax.dot_general(qh.astype(MATMUL_DTYPE), kh.astype(MATMUL_DTYPE),
                            (((1,), (1,)), ((), ())),
                            preferred_element_type=jnp.float32) * scale
        m = jnp.max(s, axis=-1, keepdims=True)
        p = jnp.exp(s - m)
        acc = acc + p / jnp.sum(p, axis=-1, keepdims=True)  # exact softmax
    o_ref[...] = acc * (1.0 / num_heads)                  # average over heads
    # TODO(synk): attention dropout (p=0.4) only affects the unused attention
    #             output (the model only consumes the weights); skipped.


def attn_weights(bar_emb, wq_h, bq_h, wk_h, bk_h, num_heads):
    n = bar_emb.shape[0]
    return pl.pallas_call(
        functools.partial(_attn_kernel, num_heads=num_heads),
        out_shape=jax.ShapeDtypeStruct((n, n), jnp.float32),
        compiler_params=pltpu.CompilerParams(vmem_limit_bytes=VMEM_LIMIT),
    )(bar_emb, wq_h, bq_h, wk_h, bk_h)


# ---------------------------------------------------------------------------
# K4: GCNConv + leaky + global_mean_pool + leaky + mu/std + rsample + z2hid/z2in
# ---------------------------------------------------------------------------
def _gcn_latent_kernel(x_ref, an_ref, gw_ref, gb_ref, muw_ref, mub_ref,
                       sw_ref, sb_ref, eps_ref, zhw_ref, zhb_ref,
                       ziw_ref, zib_ref,
                       mu_ref, std_ref, zh_ref, zi_ref):
    xw = _dot(x_ref[...], gw_ref[...])
    out = _dot(an_ref[...], xw) + gb_ref[...]
    out = jnp.where(out >= 0, out, 0.2 * out)             # leaky_relu
    score = jnp.mean(out, axis=0, keepdims=True)          # global_mean_pool
    score = jnp.where(score >= 0, score, 0.2 * score)     # leaky_relu
    mu = _dot(score, muw_ref[...]) + mub_ref[...]
    std = jnp.exp(_dot(score, sw_ref[...]) + sb_ref[...])
    z = mu + std * eps_ref[...]                           # Normal.rsample()
    mu_ref[...] = mu
    std_ref[...] = std
    zh_ref[...] = _dot(z, zhw_ref[...]) + zhb_ref[...]
    zi_ref[...] = _dot(z, ziw_ref[...]) + zib_ref[...]
    # TODO(synk): row-tile the (bar_num, bar_num) a_norm matmul for very long
    #             pieces (same pattern as K1); bar_num is small in practice.


def gcn_latent(bar_emb, a_norm, gcn_w_t, gcn_b, mu_w_t, mu_b, std_w_t, std_b,
               eps, z2h_w_t, z2h_b, z2i_w_t, z2i_b):
    Z = mu_w_t.shape[1]
    ZH = z2h_w_t.shape[1]
    ZI = z2i_w_t.shape[1]
    return pl.pallas_call(
        _gcn_latent_kernel,
        out_shape=(jax.ShapeDtypeStruct((1, Z), jnp.float32),
                   jax.ShapeDtypeStruct((1, Z), jnp.float32),
                   jax.ShapeDtypeStruct((1, ZH), jnp.float32),
                   jax.ShapeDtypeStruct((1, ZI), jnp.float32)),
        compiler_params=pltpu.CompilerParams(vmem_limit_bytes=VMEM_LIMIT),
    )(bar_emb, a_norm, gcn_w_t, gcn_b, mu_w_t, mu_b, std_w_t, std_b,
      eps, z2h_w_t, z2h_b, z2i_w_t, z2i_b)


# ---------------------------------------------------------------------------
# K5: batched sim-note decoder GRU over a time-chunk grid.
#     Flattened layout: row = t * Gp + bar.
# ---------------------------------------------------------------------------
def _sim_decoder_kernel(tok_ref, zin_ref, h0_ref,
                        wtok_ref, wz_ref, bih_ref, whh_ref, bhh_ref,
                        bw_ref, bb_ref, tgt_ref, wgt_ref,
                        hid_ref, arg_ref, loss_ref,
                        h_scr, gi_scr, *, tc, gp):
    H = whh_ref.shape[0]
    c = pl.program_id(0)
    h0 = jnp.broadcast_to(h0_ref[...], (gp, H))           # every bar restarts at z_hid

    @pl.when(c == 0)
    def _():
        h_scr[...] = h0
        loss_ref[...] = jnp.zeros_like(loss_ref)

    # ---- prologue: hoisted input projection for the whole time chunk ----
    gi_static = _dot(zin_ref[...], wz_ref[...]) + bih_ref[...]     # (1, 3H)
    gi_scr[...] = _dot(tok_ref[...], wtok_ref[...]) + gi_static    # (tc*gp, 3H)

    whh = whh_ref[...]
    bhh = bhh_ref[...]

    # ---- serial recurrence: only h @ W_hh + gates stay in the loop ----
    def step(t, h):
        row = pl.multiple_of(t * gp, gp)
        gi = gi_scr[pl.ds(row, gp), :]
        gh = _dot(h, whh) + bhh
        r = jax.nn.sigmoid(gi[:, :H] + gh[:, :H])
        z = jax.nn.sigmoid(gi[:, H:2 * H] + gh[:, H:2 * H])
        n = jnp.tanh(gi[:, 2 * H:] + r * gh[:, 2 * H:])
        h = (1.0 - z) * n + z * h
        hid_ref[pl.ds(row, gp), :] = h                    # sublane-dense store
        return h

    h_scr[...] = lax.fori_loop(0, tc, step, h_scr[...])

    # ---- post-loop: batched beat head + argmax + masked CE over the chunk ----
    hid = hid_ref[...]
    logits = _dot(hid, bw_ref[...]) + bb_ref[...]
    arg_ref[...] = _argmax_lanes(logits)
    loss_ref[...] += _masked_xent(logits, tgt_ref[...], wgt_ref[...], 0.0, 0)


def sim_decode(tok, z_in, z_hid, wtok_t, wz_t, bih, whh_t, bhh,
               beat_w_t, beat_b, tgt, wgt, *, gp, time_chunk):
    R, DSH = tok.shape
    H = whh_t.shape[0]
    tc = time_chunk
    rows = tc * gp
    n_chunks = R // rows
    const = lambda c: (0, 0)
    chunk = lambda c: (c, 0)
    grid_spec = pltpu.PrefetchScalarGridSpec(
        num_scalar_prefetch=0,
        grid=(n_chunks,),
        in_specs=[
            pl.BlockSpec((rows, DSH), chunk),             # teacher-forcing tokens
            pl.BlockSpec(z_in.shape, const),
            pl.BlockSpec(z_hid.shape, const),
            pl.BlockSpec(wtok_t.shape, const),
            pl.BlockSpec(wz_t.shape, const),
            pl.BlockSpec(bih.shape, const),
            pl.BlockSpec(whh_t.shape, const),
            pl.BlockSpec(bhh.shape, const),
            pl.BlockSpec(beat_w_t.shape, const),
            pl.BlockSpec(beat_b.shape, const),
            pl.BlockSpec((rows, 1), chunk),               # beat targets
            pl.BlockSpec((rows, 1), chunk),               # CE weights
        ],
        out_specs=[
            pl.BlockSpec((rows, H), chunk),               # hidden states (for K6)
            pl.BlockSpec((rows, 1), chunk),               # beat argmax (int32)
            pl.BlockSpec((1, 1), const),                  # loss accumulator
        ],
        scratch_shapes=[
            pltpu.VMEM((gp, H), jnp.float32),             # h carried across chunks
            pltpu.VMEM((rows, 3 * H), jnp.float32),       # hoisted gi chunk
        ])
    return pl.pallas_call(
        functools.partial(_sim_decoder_kernel, tc=tc, gp=gp),
        out_shape=(jax.ShapeDtypeStruct((R, H), jnp.float32),
                   jax.ShapeDtypeStruct((R, 1), jnp.int32),
                   jax.ShapeDtypeStruct((1, 1), jnp.float32)),
        grid_spec=grid_spec,
        compiler_params=pltpu.CompilerParams(
            dimension_semantics=("arbitrary",), vmem_limit_bytes=VMEM_LIMIT),
    )(tok, z_in, z_hid, wtok_t, wz_t, bih, whh_t, bhh, beat_w_t, beat_b, tgt, wgt)


# ---------------------------------------------------------------------------
# K6: batched note decoder GRU over a time-chunk grid.
#     Flattened layout: row = t * Sp + sim_group.
# ---------------------------------------------------------------------------
def _note_decoder_kernel(tok_ref, sim_ref, nhw_ref, nhb_ref,
                         wtok_ref, wsim_ref, bih_ref, whh_ref, bhh_ref,
                         pw_ref, pb_ref, dw_ref, db_ref,
                         ptgt_ref, dtgt_ref, wgt_ref,
                         parg_ref, darg_ref, ploss_ref, dloss_ref,
                         h_scr, gi_scr, hid_scr,
                         *, tc, sp, pitch_classes, smoothing):
    H = whh_ref.shape[0]
    c = pl.program_id(0)
    sim = sim_ref[...]
    h0 = _dot(sim, nhw_ref[...]) + nhb_ref[...]           # fused note_hid_linear

    @pl.when(c == 0)
    def _():
        h_scr[...] = h0
        ploss_ref[...] = jnp.zeros_like(ploss_ref)
        dloss_ref[...] = jnp.zeros_like(dloss_ref)

    # hoisted input projections: token part per chunk, sim part per group
    gi_static = _dot(sim, wsim_ref[...]) + bih_ref[...]   # (sp, 3H)
    gi_scr[...] = _dot(tok_ref[...], wtok_ref[...])       # (tc*sp, 3H)

    whh = whh_ref[...]
    bhh = bhh_ref[...]

    def step(t, h):
        row = pl.multiple_of(t * sp, sp)
        gi = gi_scr[pl.ds(row, sp), :] + gi_static
        gh = _dot(h, whh) + bhh
        r = jax.nn.sigmoid(gi[:, :H] + gh[:, :H])
        z = jax.nn.sigmoid(gi[:, H:2 * H] + gh[:, H:2 * H])
        n = jnp.tanh(gi[:, 2 * H:] + r * gh[:, 2 * H:])
        h = (1.0 - z) * n + z * h
        hid_scr[pl.ds(row, sp), :] = h
        return h

    h_scr[...] = lax.fori_loop(0, tc, step, h_scr[...])

    # post-loop: batched pitch/dur heads + argmax + masked (smoothed) CE
    hid = hid_scr[...]
    wgt = wgt_ref[...]
    p_logits = _dot(hid, pw_ref[...]) + pb_ref[...]
    d_logits = _dot(hid, dw_ref[...]) + db_ref[...]
    parg_ref[...] = _argmax_lanes(p_logits)
    darg_ref[...] = _argmax_lanes(d_logits)
    ploss_ref[...] += _masked_xent(p_logits, ptgt_ref[...], wgt,
                                   smoothing, pitch_classes)
    dloss_ref[...] += _masked_xent(d_logits, dtgt_ref[...], wgt, 0.0, 0)


def note_decode(tok, sim_dec, nh_w_t, nh_b, wtok_t, wsim_t, bih, whh_t, bhh,
                pitch_w_t, pitch_b, dur_w_t, dur_b, ptgt, dtgt, wgt,
                *, sp, time_chunk, pitch_classes, smoothing):
    R, TD = tok.shape
    H = whh_t.shape[0]
    tc = time_chunk
    rows = tc * sp
    n_chunks = R // rows
    const = lambda c: (0, 0)
    chunk = lambda c: (c, 0)
    grid_spec = pltpu.PrefetchScalarGridSpec(
        num_scalar_prefetch=0,
        grid=(n_chunks,),
        in_specs=[
            pl.BlockSpec((rows, TD), chunk),              # teacher-forcing tokens
            pl.BlockSpec(sim_dec.shape, const),
            pl.BlockSpec(nh_w_t.shape, const),
            pl.BlockSpec(nh_b.shape, const),
            pl.BlockSpec(wtok_t.shape, const),
            pl.BlockSpec(wsim_t.shape, const),
            pl.BlockSpec(bih.shape, const),
            pl.BlockSpec(whh_t.shape, const),
            pl.BlockSpec(bhh.shape, const),
            pl.BlockSpec(pitch_w_t.shape, const),
            pl.BlockSpec(pitch_b.shape, const),
            pl.BlockSpec(dur_w_t.shape, const),
            pl.BlockSpec(dur_b.shape, const),
            pl.BlockSpec((rows, 1), chunk),               # pitch targets
            pl.BlockSpec((rows, 1), chunk),               # dur targets
            pl.BlockSpec((rows, 1), chunk),               # CE weights
        ],
        out_specs=[
            pl.BlockSpec((rows, 1), chunk),               # pitch argmax (int32)
            pl.BlockSpec((rows, 1), chunk),               # dur argmax (int32)
            pl.BlockSpec((1, 1), const),                  # pitch loss accumulator
            pl.BlockSpec((1, 1), const),                  # dur loss accumulator
        ],
        scratch_shapes=[
            pltpu.VMEM((sp, H), jnp.float32),             # h carried across chunks
            pltpu.VMEM((rows, 3 * H), jnp.float32),       # hoisted gi chunk
            pltpu.VMEM((rows, H), jnp.float32),           # chunk hidden states
        ])
    return pl.pallas_call(
        functools.partial(_note_decoder_kernel, tc=tc, sp=sp,
                          pitch_classes=pitch_classes, smoothing=smoothing),
        out_shape=(jax.ShapeDtypeStruct((R, 1), jnp.int32),
                   jax.ShapeDtypeStruct((R, 1), jnp.int32),
                   jax.ShapeDtypeStruct((1, 1), jnp.float32),
                   jax.ShapeDtypeStruct((1, 1), jnp.float32)),
        grid_spec=grid_spec,
        compiler_params=pltpu.CompilerParams(
            dimension_semantics=("arbitrary",), vmem_limit_bytes=VMEM_LIMIT),
    )(tok, sim_dec, nh_w_t, nh_b, wtok_t, wsim_t, bih, whh_t, bhh,
      pitch_w_t, pitch_b, dur_w_t, dur_b, ptgt, dtgt, wgt)


# ----------------------------- host-side glue -------------------------------
def bar_cutting(x_np):
    """Host-side re-implementation of MG_model.bar_cutting (data dependent)."""
    bar_info = x_np[:, 0]
    zero_idx = np.nonzero(bar_info == 0)[0]
    two_idx = np.nonzero(bar_info == 2)[0]
    if two_idx.size == 0:
        indices = np.append(zero_idx, bar_info.shape[0])
        x_wo_pad = x_np
    else:
        indices = np.append(zero_idx, two_idx[0])
        x_wo_pad = x_np[:indices[-1]]
    if indices[0] != 0:
        indices = np.insert(indices, 0, 0)
    n = int(indices[-1])
    adj = np.zeros((n, n), np.float32)
    sim_indices, bar_lens, beat_info = [], [], []
    for i in range(len(indices) - 1):
        s, e = int(indices[i]), int(indices[i + 1])
        edge_info = x_wo_pad[s:e, 1]
        uniq = [int(edge_info[0])]
        for v in edge_info[1:]:
            if int(v) != uniq[-1]:
                uniq.append(int(v))
        beat_info.extend(uniq)
        bar_lens.append(len(uniq))
        for u in uniq:
            d = np.nonzero(edge_info == u)[0]
            sim_s, sim_e = s + int(d[0]), s + int(d[-1]) + 1
            adj[sim_s:sim_e, sim_s:sim_e] = 1.0
            sim_indices.append((sim_s, sim_e))
    bar_indices = np.cumsum(np.asarray(bar_lens)) - 1
    return adj, x_wo_pad, bar_indices, sim_indices, np.asarray(beat_info)


def init_params(key, cfg):
    P, B, D = cfg['pitch_num'], cfg['beat_num'], cfg['dur_num']
    E, SH, BH, Z = cfg['emb_size'], cfg['sim_hid'], cfg['bar_hid'], cfg['z_size']
    ZIN, ZHID, NH = cfg['dec_z_in'], cfg['dec_z_hid'], cfg['dec_note_hid']
    DSH = SH + E                        # dec_sim_hid_size

    keys = iter(jax.random.split(key, 64))

    def mat(shape, scale=0.1):
        return jax.random.normal(next(keys), shape, jnp.float32) * scale

    def pad_head(w_t, b):
        hin, c = w_t.shape
        wp = jnp.zeros((hin, LANE), jnp.float32).at[:, :c].set(w_t)
        bp = jnp.full((1, LANE), NEG_BIG, jnp.float32).at[0, :c].set(b)
        return wp, bp

    p = {}
    p['pitch_table'] = mat((P, E))
    p['beat_table'] = mat((B, E))
    p['dur_table'] = mat((D, E))
    # SAGEConv(2E -> SH)
    p['sage_wl_t'] = mat((2 * E, SH)); p['sage_bl'] = mat((1, SH))
    p['sage_wr_t'] = mat((2 * E, SH))
    # bar_encoder GRU(E+SH -> BH)
    p['enc_wih_t'] = mat((E + SH, 3 * BH)); p['enc_bih'] = mat((1, 3 * BH))
    p['enc_whh_t'] = mat((BH, 3 * BH)); p['enc_bhh'] = mat((1, 3 * BH))
    # MultiheadAttention (only q/k projections feed the returned weights)
    p['attn_wq_t'] = mat((BH, BH)); p['attn_bq'] = mat((1, BH))
    p['attn_wk_t'] = mat((BH, BH)); p['attn_bk'] = mat((1, BH))
    # GCNConv(BH -> BH)
    p['gcn_w_t'] = mat((BH, BH)); p['gcn_b'] = mat((1, BH))
    # latent heads
    p['mu_w_t'] = mat((BH, Z)); p['mu_b'] = mat((1, Z))
    p['std_w_t'] = mat((BH, Z)); p['std_b'] = mat((1, Z))
    p['z2hid_w_t'] = mat((Z, ZHID)); p['z2hid_b'] = mat((1, ZHID))
    p['z2in_w_t'] = mat((Z, ZIN)); p['z2in_b'] = mat((1, ZIN))
    p['sim_sos'] = mat((DSH,))
    p['note_sos'] = mat((2 * E,))
    # sim_note_decoder GRU((DSH + ZIN) -> ZHID), W_ih split by [token | z_in]
    p['simdec_wih_tok_t'] = mat((DSH, 3 * ZHID))
    p['simdec_wih_z_t'] = mat((ZIN, 3 * ZHID))
    p['simdec_bih'] = mat((1, 3 * ZHID))
    p['simdec_whh_t'] = mat((ZHID, 3 * ZHID)); p['simdec_bhh'] = mat((1, 3 * ZHID))
    p['beat_w_t'], p['beat_b'] = pad_head(mat((ZHID, B)), mat((B,)))
    # note_decoder GRU((2E + ZHID) -> NH), W_ih split by [token | sim_dec]
    p['notedec_wih_tok_t'] = mat((2 * E, 3 * NH))
    p['notedec_wih_sim_t'] = mat((ZHID, 3 * NH))
    p['notedec_bih'] = mat((1, 3 * NH))
    p['notedec_whh_t'] = mat((NH, 3 * NH)); p['notedec_bhh'] = mat((1, 3 * NH))
    p['nh_w_t'] = mat((ZHID, NH)); p['nh_b'] = mat((1, NH))
    p['pitch_w_t'], p['pitch_b'] = pad_head(mat((NH, P)), mat((P,)))
    p['dur_w_t'], p['dur_b'] = pad_head(mat((NH, D)), mat((D,)))
    return p


# ----------------------------- MG_model.forward -----------------------------
def mg_forward(x_np, params, vocab, cfg, key, *,
               sage_row_block=None, sim_time_chunk=None, note_time_chunk=None):
    E, SH, BH = cfg['emb_size'], cfg['sim_hid'], cfg['bar_hid']
    num_heads = 2

    adj, x_wo_pad, bar_indices, sim_indices, beat_info = bar_cutting(x_np)
    N = x_wo_pad.shape[0]
    S = len(sim_indices)

    # --- CPEmbeddingLayer (vocab dict lookups are host-side, like .apply_) ---
    pitch_idx = np.array([vocab['pitch2idx'].get(int(v), 0) for v in x_wo_pad[:, 2]], np.int32)
    dur_idx = np.array([vocab['dur2idx'].get(int(v), 0) for v in x_wo_pad[:, 3]], np.int32)
    beat_idx = np.array([vocab['beat2idx'].get(int(v), 0) for v in beat_info], np.int32)
    pe = jnp.take(params['pitch_table'], jnp.asarray(pitch_idx), axis=0)
    de = jnp.take(params['dur_table'], jnp.asarray(dur_idx), axis=0)
    be = jnp.take(params['beat_table'], jnp.asarray(beat_idx), axis=0)
    pd_emb = jnp.concatenate([pe, de], axis=1)                          # (N, 2E)

    # --- K1 host prep: pad rows to a block multiple, mean-adjacency + pool^T ---
    # TODO(synk): cache a_mean / pool_t / teacher-forcing index tensors per
    #             example; they are static across epochs for the same input.
    Np = _round_up(N, 8)
    rb = sage_row_block if sage_row_block is not None else _pick_row_block(Np)
    Np = _round_up(Np, rb)
    deg = adj.sum(axis=1, keepdims=True)
    a_mean = np.zeros((Np, Np), np.float32)
    a_mean[:N, :N] = adj / np.maximum(deg, 1.0)
    pool_t = np.zeros((Np, S), np.float32)                 # transposed pooling matrix
    for i, (s, e) in enumerate(sim_indices):
        pool_t[s:e, i] = 1.0 / (e - s)
    pd_emb_p = jnp.zeros((Np, 2 * E), jnp.float32).at[:N].set(pd_emb)

    sim_pooled = sage_pool(pd_emb_p, jnp.asarray(a_mean), jnp.asarray(pool_t),
                           params['sage_wl_t'], params['sage_bl'],
                           params['sage_wr_t'], row_block=rb)           # (S, SH)
    sim_note_emb = jnp.concatenate([sim_pooled, be], axis=1)            # (S, SH+E)

    # --- K2: bar encoder GRU over the sim-group sequence ---
    h_seq = gru_encode(sim_note_emb, params['enc_wih_t'], params['enc_bih'],
                       params['enc_whh_t'], params['enc_bhh'])          # (S, BH)
    bar_emb = jnp.take(h_seq, jnp.asarray(bar_indices, dtype=jnp.int32), axis=0)
    bar_num = bar_emb.shape[0]

    # --- K3: multi-head self-attention weights (per-head lane-contiguous W) ---
    dh = BH // num_heads
    wq_h = jnp.stack([params['attn_wq_t'][:, h * dh:(h + 1) * dh] for h in range(num_heads)])
    bq_h = jnp.stack([params['attn_bq'][:, h * dh:(h + 1) * dh] for h in range(num_heads)])
    wk_h = jnp.stack([params['attn_wk_t'][:, h * dh:(h + 1) * dh] for h in range(num_heads)])
    bk_h = jnp.stack([params['attn_bk'][:, h * dh:(h + 1) * dh] for h in range(num_heads)])
    weights = attn_weights(bar_emb, wq_h, bq_h, wk_h, bk_h, num_heads)

    # --- top-k attention edges -> normalized dense adjacency (XLA glue) ---
    flat = weights.reshape(-1)
    kk = int(math.floor(flat.shape[0] * 0.5))
    values, idx = lax.top_k(flat, kk)
    rows_i, cols_i = idx // bar_num, idx % bar_num
    # A[target, source] = attn[source, target]  (matches PyG source->target flow)
    A = jnp.zeros((bar_num, bar_num), jnp.float32).at[cols_i, rows_i].add(values)
    diag = jnp.diag(A)
    A = A + jnp.diag(jnp.where(diag == 0, 1.0, 0.0))   # add_remaining_self_loops
    deg_b = jnp.sum(A, axis=1)
    dinv = jnp.where(deg_b > 0, lax.rsqrt(deg_b), 0.0)
    a_norm = dinv[:, None] * A * dinv[None, :]

    # --- K4: GCN + readout + latent heads + reparameterisation ---
    eps = jax.random.normal(key, (1, cfg['z_size']), jnp.float32)
    mu, std, z_hid, z_in = gcn_latent(
        bar_emb, a_norm, params['gcn_w_t'], params['gcn_b'],
        params['mu_w_t'], params['mu_b'], params['std_w_t'], params['std_b'],
        eps, params['z2hid_w_t'], params['z2hid_b'],
        params['z2in_w_t'], params['z2in_b'])

    # --- padded, batched teacher-forcing tensors (vectorized host indexing) ---
    bar_indices = np.asarray(bar_indices)
    bar_ends = bar_indices + 1
    bar_starts = np.concatenate([[0], bar_ends[:-1]]).astype(np.int64)
    ns = (bar_ends - bar_starts).astype(np.int64)        # sim groups per bar
    G = int(bar_num)
    Gp = _round_up(G, 8)                                 # sublane-dense batch rows
    T_sim = int(ns.max())
    tc_sim = sim_time_chunk if sim_time_chunk is not None else max(1, min(T_sim, 2048 // Gp))
    Tp_sim = _round_up(T_sim, tc_sim)
    R_sim = Tp_sim * Gp

    g_arr = np.arange(S, dtype=np.int64)
    bar_of_g = np.repeat(np.arange(G, dtype=np.int64), ns)
    t_of_g = g_arr - bar_starts[bar_of_g]
    row_g = (t_of_g * Gp + bar_of_g).astype(np.int32)    # flat row = t*Gp + bar

    prev_idx = np.zeros(R_sim, np.int32)
    prev_msk = np.zeros((R_sim, 1), np.float32)
    sos_msk = np.zeros((R_sim, 1), np.float32)
    sos_msk[:Gp] = 1.0
    beat_tgt = np.zeros((R_sim, 1), np.int32)
    beat_wgt = np.zeros((R_sim, 1), np.float32)
    beat_tgt[row_g, 0] = beat_idx
    beat_wgt[row_g, 0] = 1.0 / S                         # CE reduction='mean'
    tf = t_of_g >= 1
    prev_idx[row_g[tf]] = (g_arr[tf] - 1).astype(np.int32)
    prev_msk[row_g[tf], 0] = 1.0

    sim_tok = (jnp.take(sim_note_emb, jnp.asarray(prev_idx), axis=0)
               * jnp.asarray(prev_msk)
               + params['sim_sos'][None, :] * jnp.asarray(sos_msk))     # (R_sim, DSH)

    # --- K5: batched sim-note decoder + fused beat head / argmax / beat loss ---
    hid_sim, beat_arg, beat_loss = sim_decode(
        sim_tok, z_in, z_hid,
        params['simdec_wih_tok_t'], params['simdec_wih_z_t'], params['simdec_bih'],
        params['simdec_whh_t'], params['simdec_bhh'],
        params['beat_w_t'], params['beat_b'],
        jnp.asarray(beat_tgt), jnp.asarray(beat_wgt),
        gp=Gp, time_chunk=tc_sim)

    Sp = _round_up(S, 8)
    sfi = np.zeros(Sp, np.int32)
    sfi[:S] = row_g
    sim_dec_p = jnp.take(hid_sim, jnp.asarray(sfi), axis=0)             # (Sp, ZHID)

    # --- padded note-decoder batch ---
    nn_ = np.array([e - s for (s, e) in sim_indices], np.int64)
    note_off = np.concatenate([[0], np.cumsum(nn_)[:-1]]).astype(np.int64)
    N_tot = int(nn_.sum())
    T_note = int(nn_.max())
    tc_note = note_time_chunk if note_time_chunk is not None else max(1, min(T_note, 2048 // Sp))
    Tp_note = _round_up(T_note, tc_note)
    R_note = Tp_note * Sp

    k_arr = np.arange(N_tot, dtype=np.int64)
    grp_of_k = np.repeat(np.arange(S, dtype=np.int64), nn_)
    t_of_k = k_arr - note_off[grp_of_k]
    row_k = (t_of_k * Sp + grp_of_k).astype(np.int32)    # flat row = t*Sp + group

    ntok_idx = np.zeros(R_note, np.int32)
    ntok_msk = np.zeros((R_note, 1), np.float32)
    nsos_msk = np.zeros((R_note, 1), np.float32)
    nsos_msk[:Sp] = 1.0
    pitch_tgt = np.zeros((R_note, 1), np.int32)
    dur_tgt = np.zeros((R_note, 1), np.int32)
    note_wgt = np.zeros((R_note, 1), np.float32)
    pitch_tgt[row_k, 0] = pitch_idx
    dur_tgt[row_k, 0] = dur_idx
    note_wgt[row_k, 0] = 1.0 / N_tot                     # CE reduction='mean'
    tf = t_of_k >= 1
    ntok_idx[row_k[tf]] = (k_arr[tf] - 1).astype(np.int32)   # groups tile x contiguously
    ntok_msk[row_k[tf], 0] = 1.0

    note_tok = (jnp.take(pd_emb, jnp.asarray(ntok_idx), axis=0)
                * jnp.asarray(ntok_msk)
                + params['note_sos'][None, :] * jnp.asarray(nsos_msk))  # (R_note, 2E)

    # --- K6: batched note decoder + fused pitch/dur heads, argmax and losses ---
    pitch_arg, dur_arg, pitch_loss, dur_loss = note_decode(
        note_tok, sim_dec_p,
        params['nh_w_t'], params['nh_b'],
        params['notedec_wih_tok_t'], params['notedec_wih_sim_t'], params['notedec_bih'],
        params['notedec_whh_t'], params['notedec_bhh'],
        params['pitch_w_t'], params['pitch_b'],
        params['dur_w_t'], params['dur_b'],
        jnp.asarray(pitch_tgt), jnp.asarray(dur_tgt), jnp.asarray(note_wgt),
        sp=Sp, time_chunk=tc_note,
        pitch_classes=cfg['pitch_num'], smoothing=0.1)

    # --- pred_xlike assembly (host/XLA glue, mirrors the original numpy out) ---
    row_k_j = jnp.asarray(row_k)
    pitch_xlike = jnp.take(pitch_arg[:, 0], row_k_j, axis=0)
    dur_xlike = jnp.take(dur_arg[:, 0], row_k_j, axis=0)
    idx2beat_arr = jnp.asarray(np.asarray(vocab['idx2beat'], np.float32))
    beat_arg_g = jnp.take(beat_arg[:, 0], jnp.asarray(row_g), axis=0)   # (S,)
    real_beat = jnp.take(idx2beat_arr, beat_arg_g, axis=0)
    beat_xlike = jnp.take(real_beat, jnp.asarray(grp_of_k.astype(np.int32)), axis=0)
    bar_note_counts = np.array([int(nn_[int(bar_starts[b]):int(bar_ends[b])].sum())
                                for b in range(G)], np.int64)
    bar_first = np.concatenate([[0], np.cumsum(bar_note_counts)[:-1]]).astype(np.int64)
    bar_x = np.ones(N_tot, np.float32)
    bar_x[bar_first] = 0.0
    pred_xlike = jnp.stack([jnp.asarray(bar_x), beat_xlike,
                            pitch_xlike.astype(jnp.float32),
                            dur_xlike.astype(jnp.float32)]).astype(jnp.int32)

    return (beat_loss[0, 0], pitch_loss[0, 0], dur_loss[0, 0], (mu, std), pred_xlike)


# ----------------------------------- main ------------------------------------
if __name__ == "__main__":
    P_NUM, B_NUM, D_NUM = 16, 8, 8
    vocab = {
        'idx2pitch': list(range(P_NUM)),
        'pitch2idx': {v: i for i, v in enumerate(range(P_NUM))},
        'idx2beat': list(range(B_NUM)),
        'beat2idx': {v: i for i, v in enumerate(range(B_NUM))},
        'idx2dur': list(range(D_NUM)),
        'dur2idx': {v: i for i, v in enumerate(range(D_NUM))},
    }
    # lane-dense config: every hidden dim is a multiple of 128 (2E = 128)
    cfg = dict(pitch_num=P_NUM, beat_num=B_NUM, dur_num=D_NUM,
               emb_size=64, sim_hid=128, bar_hid=128, z_size=128,
               dec_z_in=128, dec_z_hid=128, dec_note_hid=128)

    key = jax.random.PRNGKey(0)
    pkey, nkey, tkey1, tkey2 = jax.random.split(key, 4)
    params = init_params(pkey, cfg)

    # synthetic input token sequence x: columns = [bar_flag, beat, pitch, dur]
    n_bars, notes_per_bar = 2, 8
    N = n_bars * notes_per_bar
    bar_col = np.ones(N, np.int64)
    bar_col[::notes_per_bar] = 0                     # 0 marks the start of a bar
    beat_col = np.tile(np.repeat(np.arange(4), 2), n_bars)
    pitch_col = np.asarray(jax.random.randint(tkey1, (N,), 0, P_NUM))
    dur_col = np.asarray(jax.random.randint(tkey2, (N,), 0, D_NUM))
    x = np.stack([bar_col, beat_col, pitch_col, dur_col], axis=1).astype(np.int64)

    # small explicit chunk sizes to exercise the multi-chunk grid paths; real
    # callers use the auto defaults (row budget ~2048).
    beat_loss, pitch_loss, dur_loss, dist, pred_xlike = mg_forward(
        x, params, vocab, cfg, nkey,
        sage_row_block=8, sim_time_chunk=2, note_time_chunk=1)
    jax.block_until_ready((beat_loss, pitch_loss, dur_loss, dist, pred_xlike))
    print("KERNEL_OK")
</pallas_src>

<mosaic_0001>
module attributes {stable_mosaic.version = 11 : i64} {
  func.func @_sage_pool_kernel(%arg0: i32, %arg1: memref<16x128xf32, #tpu.memory_space<vmem>>, %arg2: memref<8x16xf32, #tpu.memory_space<vmem>>, %arg3: memref<8x8xf32, #tpu.memory_space<vmem>>, %arg4: memref<128x128xf32, #tpu.memory_space<vmem>>, %arg5: memref<1x128xf32, #tpu.memory_space<vmem>>, %arg6: memref<128x128xf32, #tpu.memory_space<vmem>>, %arg7: memref<8x128xf32, #tpu.memory_space<vmem>>) attributes {dimension_semantics = [#tpu.dimension_semantics<arbitrary>], iteration_bounds = array<i64: 2>, scalar_prefetch = 0 : i64, scratch_operands = 0 : i64, tpu.core_type = #tpu.core_type<tc>, window_params = [{pipeline_mode = #tpu.pipeline_mode<synchronous>, transform_indices = @transform_0, window_bounds = array<i64: 16, 128>}, {transform_indices = @transform_1, window_bounds = array<i64: 8, 16>}, {transform_indices = @transform_2, window_bounds = array<i64: 8, 8>}, {pipeline_mode = #tpu.pipeline_mode<synchronous>, transform_indices = @transform_3, window_bounds = array<i64: 128, 128>}, {pipeline_mode = #tpu.pipeline_mode<synchronous>, transform_indices = @transform_4, window_bounds = array<i64: 1, 128>}, {pipeline_mode = #tpu.pipeline_mode<synchronous>, transform_indices = @transform_5, window_bounds = array<i64: 128, 128>}, {pipeline_mode = #tpu.pipeline_mode<synchronous>, transform_indices = @transform_6, window_bounds = array<i64: 8, 128>}]} {
    %c0_i32 = arith.constant 0 : i32
    %0 = arith.cmpi eq, %arg0, %c0_i32 : i32
    %1 = arith.extui %0 : i1 to i32
    %c0_i32_0 = arith.constant 0 : i32
    %2 = arith.cmpi ne, %1, %c0_i32_0 : i32
    scf.if %2 {
      %cst_24 = arith.constant 0.000000e+00 : f32
      %44 = vector.broadcast %cst_24 : f32 to vector<8x128xf32>
      %c0_25 = arith.constant 0 : index
      %c0_26 = arith.constant 0 : index
      %45 = vector.load %arg7[%c0_25, %c0_26] : memref<8x128xf32, #tpu.memory_space<vmem>>, vector<8x128xf32>
      tpu.vector_store %arg7[%c0_25, %c0_26], %44 {strides = array<i32>} : memref<8x128xf32, #tpu.memory_space<vmem>>, vector<8x128xf32>,
    } else {
    }
    %c0 = arith.constant 0 : index
    %c0_1 = arith.constant 0 : index
    %3 = vector.load %arg1[%c0, %c0_1] : memref<16x128xf32, #tpu.memory_space<vmem>>, vector<16x128xf32>
    %c8_i32 = arith.constant 8 : i32
    %4 = arith.muli %arg0, %c8_i32 : i32
    %5 = tpu.assume_multiple %4, 8 : i32
    %6 = arith.index_cast %5 : i32 to index
    %c0_2 = arith.constant 0 : index
    %7 = vector.load %arg1[%6, %c0_2] : memref<16x128xf32, #tpu.memory_space<vmem>>, vector<8x128xf32>
    %c0_3 = arith.constant 0 : index
    %c0_4 = arith.constant 0 : index
    %8 = vector.load %arg2[%c0_3, %c0_4] : memref<8x16xf32, #tpu.memory_space<vmem>>, vector<8x16xf32>
    %9 = arith.truncf %8 : vector<8x16xf32> to vector<8x16xbf16>
    %10 = arith.truncf %3 : vector<16x128xf32> to vector<16x128xbf16>
    %cst = arith.constant dense<0.000000e+00> : vector<8x128xf32>
    %11 = tpu.matmul %9, %10, %cst {dimension_numbers = #tpu.dot_dimension_numbers<[1], [0], [0], [1], [0, 0, 1, 1], [], []>} : vector<8x16xbf16>, vector<16x128xbf16>, vector<8x128xf32> -> vector<8x128xf32>
    %c0_5 = arith.constant 0 : index
    %c0_6 = arith.constant 0 : index
    %12 = vector.load %arg4[%c0_5, %c0_6] : memref<128x128xf32, #tpu.memory_space<vmem>>, vector<128x128xf32>
    %13 = arith.truncf %11 : vector<8x128xf32> to vector<8x128xbf16>
    %14 = arith.truncf %12 : vector<128x128xf32> to vector<128x128xbf16>
    %cst_7 = arith.constant dense<0.000000e+00> : vector<8x128xf32>
    %15 = tpu.matmul %13, %14, %cst_7 {dimension_numbers = #tpu.dot_dimension_numbers<[1], [0], [0], [1], [0, 0, 1, 1], [], []>} : vector<8x128xbf16>, vector<128x128xbf16>, vector<8x128xf32> -> vector<8x128xf32>
    %c0_8 = arith.constant 0 : index
    %c0_9 = arith.constant 0 : index
    %16 = vector.load %arg5[%c0_8, %c0_9] : memref<1x128xf32, #tpu.memory_space<vmem>>, vector<1x128xf32>
    %17 = vector.broadcast %16 : vector<1x128xf32> to vector<8x128xf32>
    %18 = arith.addf %15, %17 : vector<8x128xf32>
    %c0_10 = arith.constant 0 : index
    %c0_11 = arith.constant 0 : index
    %19 = vector.load %arg6[%c0_10, %c0_11] : memref<128x128xf32, #tpu.memory_space<vmem>>, vector<128x128xf32>
    %20 = arith.truncf %7 : vector<8x128xf32> to vector<8x128xbf16>
    %21 = arith.truncf %19 : vector<128x128xf32> to vector<128x128xbf16>
    %cst_12 = arith.constant dense<0.000000e+00> : vector<8x128xf32>
    %22 = tpu.matmul %20, %21, %cst_12 {dimension_numbers = #tpu.dot_dimension_numbers<[1], [0], [0], [1], [0, 0, 1, 1], [], []>} : vector<8x128xbf16>, vector<128x128xbf16>, vector<8x128xf32> -> vector<8x128xf32>
    %23 = arith.addf %18, %22 : vector<8x128xf32>
    %24 = arith.mulf %23, %23 : vector<8x128xf32>
    %cst_13 = arith.constant dense<0.000000e+00> : vector<8xf32>
    %25 = vector.multi_reduction <add>, %24, %cst_13 [1] : vector<8x128xf32> to vector<8xf32>
    %26 = vector.shape_cast %25 : vector<8xf32> to vector<8x1xf32>
    %cst_14 = arith.constant 1.000000e-24 : f32
    %27 = vector.broadcast %cst_14 : f32 to vector<8x1xf32>
    %28 = arith.maximumf %26, %27 : vector<8x1xf32>
    %29 = math.rsqrt %28 : vector<8x1xf32>
    %30 = vector.broadcast %29 : vector<8x1xf32> to vector<8x128xf32>
    %31 = arith.mulf %23, %30 : vector<8x128xf32>
    %cst_15 = arith.constant 0.000000e+00 : f32
    %32 = vector.broadcast %cst_15 : f32 to vector<8x128xf32>
    %33 = arith.cmpf oge, %31, %32 : vector<8x128xf32>
    %cst_16 = arith.constant 2.000000e-01 : f32
    %34 = vector.broadcast %cst_16 : f32 to vector<8x128xf32>
    %35 = arith.mulf %34, %31 : vector<8x128xf32>
    %36 = arith.select %33, %31, %35 : vector<8x128xi1>, vector<8x128xf32>
    %c0_17 = arith.constant 0 : index
    %c0_18 = arith.constant 0 : index
    %37 = vector.load %arg7[%c0_17, %c0_18] : memref<8x128xf32, #tpu.memory_space<vmem>>, vector<8x128xf32>
    %c0_19 = arith.constant 0 : index
    %c0_20 = arith.constant 0 : index
    %38 = vector.load %arg3[%c0_19, %c0_20] : memref<8x8xf32, #tpu.memory_space<vmem>>, vector<8x8xf32>
    %39 = arith.truncf %38 : vector<8x8xf32> to vector<8x8xbf16>
    %40 = arith.truncf %36 : vector<8x128xf32> to vector<8x128xbf16>
    %cst_21 = arith.constant dense<0.000000e+00> : vector<8x128xf32>
    %41 = tpu.matmul %39, %40, %cst_21 {dimension_numbers = #tpu.dot_dimension_numbers<[0], [0], [1], [1], [0, 1, 1, 1], [], []>} : vector<8x8xbf16>, vector<8x128xbf16>, vector<8x128xf32> -> vector<8x128xf32>
    %42 = arith.addf %37, %41 : vector<8x128xf32>
    %c0_22 = arith.constant 0 : index
    %c0_23 = arith.constant 0 : index
    %43 = vector.load %arg7[%c0_22, %c0_23] : memref<8x128xf32, #tpu.memory_space<vmem>>, vector<8x128xf32>
    tpu.vector_store %arg7[%c0_22, %c0_23], %42 {strides = array<i32>} : memref<8x128xf32, #tpu.memory_space<vmem>>, vector<8x128xf32>,
    return
  }
  func.func @transform_0(%arg0: i32) -> (i32, i32) {
    %c0_i32 = arith.constant 0 : i32
    %c0_i32_0 = arith.constant 0 : i32
    %c0_i32_1 = arith.constant 0 : i32
    return %c0_i32, %c0_i32_0 : i32, i32
  }
  func.func @transform_1(%arg0: i32) -> (i32, i32) {
    %c0_i32 = arith.constant 0 : i32
    %c0_i32_0 = arith.constant 0 : i32
    return %arg0, %c0_i32 : i32, i32
  }
  func.func @transform_2(%arg0: i32) -> (i32, i32) {
    %c0_i32 = arith.constant 0 : i32
    %c0_i32_0 = arith.constant 0 : i32
    return %arg0, %c0_i32 : i32, i32
  }
  func.func @transform_3(%arg0: i32) -> (i32, i32) {
    %c0_i32 = arith.constant 0 : i32
    %c0_i32_0 = arith.constant 0 : i32
    %c0_i32_1 = arith.constant 0 : i32
    return %c0_i32, %c0_i32_0 : i32, i32
  }
  func.func @transform_4(%arg0: i32) -> (i32, i32) {
    %c0_i32 = arith.constant 0 : i32
    %c0_i32_0 = arith.constant 0 : i32
    %c0_i32_1 = arith.constant 0 : i32
    return %c0_i32, %c0_i32_0 : i32, i32
  }
  func.func @transform_5(%arg0: i32) -> (i32, i32) {
    %c0_i32 = arith.constant 0 : i32
    %c0_i32_0 = arith.constant 0 : i32
    %c0_i32_1 = arith.constant 0 : i32
    return %c0_i32, %c0_i32_0 : i32, i32
  }
  func.func @transform_6(%arg0: i32) -> (i32, i32) {
    %c0_i32 = arith.constant 0 : i32
    %c0_i32_0 = arith.constant 0 : i32
    %c0_i32_1 = arith.constant 0 : i32
    return %c0_i32, %c0_i32_0 : i32, i32
  }
}

</mosaic_0001>

<llo_original>
// kernel: tpu_custom_call.1
$region0: #{tpu_custom_call.1}
  #allocation0 [shape = 'u32[]', space=smem, size = 0x4, offset = 0x4, fixed_abs, tag = 'smem constant byte address 0x4 - core index']
  #allocation1 [shape = 'u32[144,128]{1,0:T(1,128)}', space=vmem, size = 0x12000, scoped, tag = 'internal scratch']
  %s0 = inlined_call_operand.vmem [shape: f32[16,128], index: 0, kind: input, shape index: {}]
  %s1 = inlined_call_operand.hbm [shape: f32[16,16], index: 1, kind: input, shape index: {}]
  %s2 = inlined_call_operand.vmem [shape: f32[16,8], index: 2, kind: input, shape index: {}]
  %s3 = inlined_call_operand.hbm [shape: f32[128,128], index: 3, kind: input, shape index: {}]
  %s4 = inlined_call_operand.vmem [shape: f32[1,128], index: 4, kind: input, shape index: {}]
  %s5 = inlined_call_operand.hbm [shape: f32[128,128], index: 5, kind: input, shape index: {}]
  %s6 = inlined_call_operand.hbm [shape: f32[8,128], index: 6, kind: output, shape index: {}]
  %s7 = sld [smem:[#allocation0]]
  $region73: #{tpu_custom_call.1} parent=0
    _
  %s9 = ssub.s32 1, %s7
  %s10 = scalar_select 0, %s9, %s7
  $region1: #{tpu_custom_call.1} parent=0
    #allocation2 [shape = 'u8[8192]{0}', space=vmem, size = 0x2000, scoped, tag = 'input window, operand 1']
    #allocation3 [shape = 's32[2]{0}', space=sflag, size = 0x8, scoped, tag = 'scoped memory for tpu_custom_call.1']
    #allocation4 [shape = 's32[2]{0}', space=sflag, size = 0x8, scoped, tag = 'scoped memory for tpu_custom_call.1']
    #allocation5 [shape = 'u8[65536]{0}', space=vmem, size = 0x10000, scoped, tag = 'input window, operand 3, single buffered']
    #allocation6 [shape = 's32[1]{0}', space=sflag, size = 0x4, scoped, tag = 'scoped memory for tpu_custom_call.1']
    #allocation7 [shape = 'u8[65536]{0}', space=vmem, size = 0x10000, scoped, tag = 'input window, operand 5, single buffered']
    #allocation8 [shape = 'u8[4096]{0}', space=vmem, size = 0x1000, scoped, tag = 'output window, operand 0, single buffered']
    %11 = vsyncpa [#allocation3], 0
    %s12 = scalar_lea.sflag [#allocation3], 1
    %13 = vsyncpa %s12, 0
    %14 = vsyncpa [#allocation6], 0
    %15 = vsyncpa [#allocation4], 0
    loop: start=0, step=1, limit=4
    $region2: #{tpu_custom_call.1} parent=1 // loop_pre_header
      _
    $region3: #{tpu_custom_call.1} parent=1 // loop_header
      %s17 = sphi 0, %s21
      %p18 = scmp.ge.s32.totalorder %s17, 4
      %s25 = sphi 0, %s25
      %s27 = sphi 0, %s25
      %s28 = sphi 0, %s27
      %s42 = sphi 0, %s28
      %s48 = sphi 0, %s50
      %s51 = sphi 0, %s48
      %s52 = sphi 0, %s51
      %s68 = sphi 0, %s52
      %s74 = sphi 0, %s76
      %s77 = sphi 0, %s74
      %s78 = sphi 0, %s77
      %s94 = sphi 0, %s78
      %s98 = sphi 0, %s98
      %s100 = sphi 0, %s98
      %s101 = sphi 0, %s100
      %s115 = sphi 0, %s101
      %s119 = sphi 0, %s119
      %s121 = sphi 0, %s119
      %s122 = sphi 0, %s121
      %s136 = sphi 0, %s122
      %s140 = sphi 0, %s140
      %s142 = sphi 0, %s140
      %s143 = sphi 0, %s142
      %s157 = sphi 0, %s143
      %s161 = sphi 0, %s161
      %s163 = sphi 0, %s161
      %s164 = sphi 0, %s163
      %s178 = sphi 0, %s164
    $region4: #{tpu_custom_call.1} parent=1 // loop_header_branch
      %20 = sbr.rel (%p18) target = $region8
    $region5: #{tpu_custom_call.1} parent=1 // loop_body
      %s22 = ssub.s32 %s17, 1
      %s23 = ssub.s32 %s17, 2
      %s24 = sadd.s32 %s17, 1
      %s26 = sadd.s32 %s25, 1
      %p29 = scmp.eq.s32.totalorder %s17, 1
      %p30 = scmp.ne.s32.totalorder %s25, %s27
      %p31 = scmp.eq.s32.totalorder %s17, 0
      %p32 = por %p30, %p31
      %p33 = scmp.ne.s32.totalorder %s25, %s27
      %p34 = scmp.eq.s32.totalorder %s22, 1
      %p35 = por %p33, %p34
      %p36 = scmp.ne.s32.totalorder %s27, %s28
      %p37 = scmp.eq.s32.totalorder %s22, 0
      %p38 = por %p36, %p37
      %p39 = scmp.ne.s32.totalorder %s27, %s28
      %p40 = scmp.eq.s32.totalorder %s23, 1
      %p41 = por %p39, %p40
      %p43 = scmp.ne.s32.totalorder %s28, %s42
      %p44 = scmp.eq.s32.totalorder %s23, 0
      %p45 = por %p43, %p44
      %s46 = ssub.s32 %s17, %s24
      %p47 = scmp.eq.s32.totalorder %s46, 0
      %s49 = sadd.s32 %s48, 1
      %s50 = scalar_select %p47, %s48, %s49
      %p53 = pneg %p47
      %p54 = scmp.eq.s32.totalorder %s17, 1
      %p55 = por %p53, %p54
      %p56 = scmp.ne.s32.totalorder %s48, %s51
      %p57 = scmp.eq.s32.totalorder %s17, 0
      %p58 = por %p56, %p57
      %p59 = scmp.ne.s32.totalorder %s48, %s51
      %p60 = scmp.eq.s32.totalorder %s22, 1
      %p61 = por %p59, %p60
      %p62 = scmp.ne.s32.totalorder %s51, %s52
      %p63 = scmp.eq.s32.totalorder %s22, 0
      %p64 = por %p62, %p63
      %p65 = scmp.ne.s32.totalorder %s51, %s52
      %p66 = scmp.eq.s32.totalorder %s23, 1
      %p67 = por %p65, %p66
      %p69 = scmp.ne.s32.totalorder %s52, %s68
      %p70 = scmp.eq.s32.totalorder %s23, 0
      %p71 = por %p69, %p70
      %s72 = ssub.s32 %s17, %s24
      %p73 = scmp.eq.s32.totalorder %s72, 0
      %s75 = sadd.s32 %s74, 1
      %s76 = scalar_select %p73, %s74, %s75
      %p79 = pneg %p73
      %p80 = scmp.eq.s32.totalorder %s17, 1
      %p81 = por %p79, %p80
      %p82 = scmp.ne.s32.totalorder %s74, %s77
      %p83 = scmp.eq.s32.totalorder %s17, 0
      %p84 = por %p82, %p83
      %p85 = scmp.ne.s32.totalorder %s74, %s77
      %p86 = scmp.eq.s32.totalorder %s22, 1
      %p87 = por %p85, %p86
      %p88 = scmp.ne.s32.totalorder %s77, %s78
      %p89 = scmp.eq.s32.totalorder %s22, 0
      %p90 = por %p88, %p89
      %p91 = scmp.ne.s32.totalorder %s77, %s78
      %p92 = scmp.eq.s32.totalorder %s23, 1
      %p93 = por %p91, %p92
      %p95 = scmp.ne.s32.totalorder %s78, %s94
      %p96 = scmp.eq.s32.totalorder %s23, 0
      %p97 = por %p95, %p96
      %s99 = sadd.s32 %s98, 1
      %p102 = scmp.eq.s32.totalorder %s17, 1
      %p103 = scmp.ne.s32.totalorder %s98, %s100
      %p104 = scmp.eq.s32.totalorder %s17, 0
      %p105 = por %p103, %p104
      %p106 = scmp.ne.s32.totalorder %s98, %s100
      %p107 = scmp.eq.s32.totalorder %s22, 1
      %p108 = por %p106, %p107
      %p109 = scmp.ne.s32.totalorder %s100, %s101
      %p110 = scmp.eq.s32.totalorder %s22, 0
      %p111 = por %p109, %p110
      %p112 = scmp.ne.s32.totalorder %s100, %s101
      %p113 = scmp.eq.s32.totalorder %s23, 1
      %p114 = por %p112, %p113
      %p116 = scmp.ne.s32.totalorder %s101, %s115
      %p117 = scmp.eq.s32.totalorder %s23, 0
      %p118 = por %p116, %p117
      %s120 = sadd.s32 %s119, 1
      %p123 = scmp.eq.s32.totalorder %s17, 1
      %p124 = scmp.ne.s32.totalorder %s119, %s121
      %p125 = scmp.eq.s32.totalorder %s17, 0
      %p126 = por %p124, %p125
      %p127 = scmp.ne.s32.totalorder %s119, %s121
      %p128 = scmp.eq.s32.totalorder %s22, 1
      %p129 = por %p127, %p128
      %p130 = scmp.ne.s32.totalorder %s121, %s122
      %p131 = scmp.eq.s32.totalorder %s22, 0
      %p132 = por %p130, %p131
      %p133 = scmp.ne.s32.totalorder %s121, %s122
      %p134 = scmp.eq.s32.totalorder %s23, 1
      %p135 = por %p133, %p134
      %p137 = scmp.ne.s32.totalorder %s122, %s136
      %p138 = scmp.eq.s32.totalorder %s23, 0
      %p139 = por %p137, %p138
      %s141 = sadd.s32 %s140, 1
      %p144 = scmp.eq.s32.totalorder %s17, 1
      %p145 = scmp.ne.s32.totalorder %s140, %s142
      %p146 = scmp.eq.s32.totalorder %s17, 0
      %p147 = por %p145, %p146
      %p148 = scmp.ne.s32.totalorder %s140, %s142
      %p149 = scmp.eq.s32.totalorder %s22, 1
      %p150 = por %p148, %p149
      %p151 = scmp.ne.s32.totalorder %s142, %s143
      %p152 = scmp.eq.s32.totalorder %s22, 0
      %p153 = por %p151, %p152
      %p154 = scmp.ne.s32.totalorder %s142, %s143
      %p155 = scmp.eq.s32.totalorder %s23, 1
      %p156 = por %p154, %p155
      %p158 = scmp.ne.s32.totalorder %s143, %s157
      %p159 = scmp.eq.s32.totalorder %s23, 0
      %p160 = por %p158, %p159
      %s162 = sadd.s32 %s161, 1
      %p165 = scmp.eq.s32.totalorder %s17, 1
      %p166 = scmp.ne.s32.totalorder %s161, %s163
      %p167 = scmp.eq.s32.totalorder %s17, 0
      %p168 = por %p166, %p167
      %p169 = scmp.ne.s32.totalorder %s161, %s163
      %p170 = scmp.eq.s32.totalorder %s22, 1
      %p171 = por %p169, %p170
      %p172 = scmp.ne.s32.totalorder %s163, %s164
      %p173 = scmp.eq.s32.totalorder %s22, 0
      %p174 = por %p172, %p173
      %p175 = scmp.ne.s32.totalorder %s163, %s164
      %p176 = scmp.eq.s32.totalorder %s23, 1
      %p177 = por %p175, %p176
      %p179 = scmp.ne.s32.totalorder %s164, %s178
      %p180 = scmp.eq.s32.totalorder %s23, 0
      %p181 = por %p179, %p180
      %p182 = scmp.le.s32.totalorder 1, %s17
      %p183 = scmp.lt.s32.totalorder %s17, 3
      %p184 = pnand %p182, %p183
      %p185 = pneg %p184
      // Predicated region
      $region9: #{tpu_custom_call.1} parent=5 // pred_check
        _
      $region10: #{tpu_custom_call.1} parent=5 // pred_check_branch
        %187 = sbr.rel (%p184) target = $region12
      $region11: #{tpu_custom_call.1} parent=5 // pred_region
        %s188 = ssub.s32 %s17, 1
        // Predicated region
        $region13: #{tpu_custom_call.1} parent=11 // pred_check
          %p189 = pneg %p38
        $region14: #{tpu_custom_call.1} parent=11 // pred_check_branch
          %191 = sbr.rel (%p189) target = $region16
        $region15: #{tpu_custom_call.1} parent=11 // pred_region
          _
        $region16: #{tpu_custom_call.1} parent=11 // pred_fallthru
          _
        // Predicated region
        $region17: #{tpu_custom_call.1} parent=11 // pred_check
          %p192 = pneg %p111
        $region18: #{tpu_custom_call.1} parent=11 // pred_check_branch
          %194 = sbr.rel (%p192) target = $region20
        $region19: #{tpu_custom_call.1} parent=11 // pred_region
          %s196 = ssub.s32 2048, 2048
          %197 = vsyncadd [#allocation6], %s196
          %s198 = sshll.u32 [#allocation5], 4
          %s199 = int_to_ptr.vmem [resolvable:$true] %s198
          %204 = dma.hbm_to_vmem [thread:$0]  %s3, 2048, %s199, [#allocation6], 128, 128, 8
        $region20: #{tpu_custom_call.1} parent=11 // pred_fallthru
          _
        // Predicated region
        $region21: #{tpu_custom_call.1} parent=11 // pred_check
          %p205 = pneg %p132
        $region22: #{tpu_custom_call.1} parent=11 // pred_check_branch
          %207 = sbr.rel (%p205) target = $region24
        $region23: #{tpu_custom_call.1} parent=11 // pred_region
          _
        $region24: #{tpu_custom_call.1} parent=11 // pred_fallthru
          _
        // Predicated region
        $region25: #{tpu_custom_call.1} parent=11 // pred_check
          %p208 = pneg %p153
        $region26: #{tpu_custom_call.1} parent=11 // pred_check_branch
          %210 = sbr.rel (%p208) target = $region28
        $region27: #{tpu_custom_call.1} parent=11 // pred_region
          %s212 = ssub.s32 2048, 2048
          %213 = vsyncadd [#allocation6], %s212
          %s214 = sshll.u32 [#allocation7], 4
          %s215 = int_to_ptr.vmem [resolvable:$true] %s214
          %220 = dma.hbm_to_vmem [thread:$0]  %s5, 2048, %s215, [#allocation6], 128, 128, 8
        $region28: #{tpu_custom_call.1} parent=11 // pred_fallthru
          _
      $region12: #{tpu_custom_call.1} parent=5 // pred_fallthru
        _
      %p221 = scmp.lt.s32.totalorder %s17, 2
      // Predicated region
      $region29: #{tpu_custom_call.1} parent=5 // pred_check
        %p222 = pneg %p221
      $region30: #{tpu_custom_call.1} parent=5 // pred_check_branch
        %224 = sbr.rel (%p222) target = $region32
      $region31: #{tpu_custom_call.1} parent=5 // pred_region
        // Predicated region
        $region33: #{tpu_custom_call.1} parent=31 // pred_check
          %p225 = pneg %p58
        $region34: #{tpu_custom_call.1} parent=31 // pred_check_branch
          %227 = sbr.rel (%p225) target = $region36
        $region35: #{tpu_custom_call.1} parent=31 // pred_region
          %s228 = sand.u32 %s48, 1
          %s229 = scalar_lea.sflag [#allocation3], %s228
          %s230 = sand.u32 %s48, 1
          %s231 = smul.addr %s230, 8
          %s232 = scalar_lea.vmem [#allocation2], %s231
          %s234 = ssub.s32 128, 128
          %235 = vsyncadd %s229, %s234
          %s236 = smul.addr %s17, 128
          %s237 = scalar_lea.hbm %s1, %s236
          %s239 = sshll.u32 %s232, 4
          %s240 = int_to_ptr.vmem [resolvable:$true] %s239
          %242 = dma.hbm_to_vmem [thread:$0]  %s237, 128, %s240, %s229
        $region36: #{tpu_custom_call.1} parent=31 // pred_fallthru
          _
        // Predicated region
        $region37: #{tpu_custom_call.1} parent=31 // pred_check
          %p243 = pneg %p84
        $region38: #{tpu_custom_call.1} parent=31 // pred_check_branch
          %245 = sbr.rel (%p243) target = $region40
        $region39: #{tpu_custom_call.1} parent=31 // pred_region
          %p246 = scmp.lt.s32.totalorder %s17, 1
          %s247 = scalar_select %p246, %s17, 1
          %s248 = smul.addr %s247, 8
          %s249 = scalar_lea.vmem %s2, %s248
        $region40: #{tpu_custom_call.1} parent=31 // pred_fallthru
          _
      $region32: #{tpu_custom_call.1} parent=5 // pred_fallthru
        _
      %p250 = scmp.le.s32.totalorder 1, %s17
      %p251 = scmp.lt.s32.totalorder %s17, 3
      %p252 = pnand %p250, %p251
      %p253 = pneg %p252
      // Predicated region
      $region41: #{tpu_custom_call.1} parent=5 // pred_check
        _
      $region42: #{tpu_custom_call.1} parent=5 // pred_check_branch
        %255 = sbr.rel (%p252) target = $region44
      $region43: #{tpu_custom_call.1} parent=5 // pred_region
        %s256 = ssub.s32 %s17, 1
        %s257 = sand.u32 %s51, 1
        %s258 = scalar_lea.sflag [#allocation3], %s257
        %s259 = sand.u32 %s51, 1
        %s260 = smul.addr %s259, 8
        %s261 = scalar_lea.vmem [#allocation2], %s260
        // Predicated region
        $region45: #{tpu_custom_call.1} parent=43 // pred_check
          %p262 = pneg %p64
        $region46: #{tpu_custom_call.1} parent=43 // pred_check_branch
          %264 = sbr.rel (%p262) target = $region48
        $region47: #{tpu_custom_call.1} parent=43 // pred_region
          %265 = dma.done %s258, 128
        $region48: #{tpu_custom_call.1} parent=43 // pred_fallthru
          _
        // Predicated region
        $region49: #{tpu_custom_call.1} parent=43 // pred_check
          %p266 = pneg %p111
        $region50: #{tpu_custom_call.1} parent=43 // pred_check_branch
          %268 = sbr.rel (%p266) target = $region52
        $region51: #{tpu_custom_call.1} parent=43 // pred_region
          %269 = dma.done [#allocation6], 2048
        $region52: #{tpu_custom_call.1} parent=43 // pred_fallthru
          _
        // Predicated region
        $region53: #{tpu_custom_call.1} parent=43 // pred_check
          %p270 = pneg %p153
        $region54: #{tpu_custom_call.1} parent=43 // pred_check_branch
          %272 = sbr.rel (%p270) target = $region56
        $region55: #{tpu_custom_call.1} parent=43 // pred_region
          %273 = dma.done [#allocation6], 2048
        $region56: #{tpu_custom_call.1} parent=43 // pred_fallthru
          _
        %p274 = pneg %p38
        %p275 = pneg %p35
        %s276 = sand.u32 %s51, 1
        %s277 = scalar_lea.sflag [#allocation3], %s276
        %s278 = sand.u32 %s51, 1
        %s279 = smul.addr %s278, 8
        %s280 = scalar_lea.vmem [#allocation2], %s279
        %p281 = pneg %p64
        %p282 = pneg %p61
        %p283 = scmp.lt.s32.totalorder %s22, 1
        %s284 = scalar_select %p283, %s22, 1
        %s285 = smul.addr %s284, 8
        %s286 = scalar_lea.vmem %s2, %s285
        %p287 = pneg %p90
        %p288 = pneg %p87
        %p289 = pneg %p111
        %p290 = pneg %p108
        %p291 = pneg %p132
        %p292 = pneg %p129
        %p293 = pneg %p153
        %p294 = pneg %p150
        %p295 = pneg %p174
        %p296 = pneg %p171
        %p297 = scmp.lt.s32.totalorder %s22, 1
        %s298 = scalar_select %p297, %s22, 1
        %s299 = smul.addr %s298, 8
        %s300 = scalar_lea.vmem %s2, %s299
        %p302 = scmp.eq.s32.totalorder %s22, 0
        // Predicated region
        $region57: #{tpu_custom_call.1} parent=43 // pred_check
          %p303 = pneg %p302
        $region58: #{tpu_custom_call.1} parent=43 // pred_check_branch
          %305 = sbr.rel (%p303) target = $region60
        $region59: #{tpu_custom_call.1} parent=43 // pred_region
          %306 = vst [vmem:[#allocation8] sm:$0xff] 0.0
        $region60: #{tpu_custom_call.1} parent=43 // pred_fallthru
          _
        %v307 = vld [vmem:[%s0] sm:$0xff]
        %v308 = vld [vmem:[%s0 + $0x8] sm:$0xff]
        %s309 = smul.u32 %s22, 8
        %s310 = scalar_lea.vmem %s0, %s309
        %v311 = vld [vmem:[%s310] sm:$0xff]
        %v312 = vld [vmem:[%s261] sm:$0xff]
        %v313 = vpack.c.bf16 %v312, %v312
        %v314 = vpack.c.bf16 %v308, %v307
        %vm315 = vcmask 130048
        %v317 = vsel %vm315, %v313, 0
        %319 = vmatprep.subr.bf16.mxu0 0
        %320 = vmatpush1.bf16.msra.mxu0 0
        %321 = vmatprep.subr.bf16.mxu0 0
        %322 = vmatpush1.bf16.msra.mxu0 0
        %323 = vmatprep.subr.bf16.mxu0 0
        %324 = vmatpush1.bf16.msra.mxu0 0
        %325 = vmatprep.subr.bf16.mxu0 0
        %326 = vmatpush1.bf16.msra.mxu0 0
        %327 = vmatprep.subr.bf16.mxu0 0
        %328 = vmatpush1.bf16.msra.mxu0 0
        %329 = vmatprep.subr.bf16.mxu0 0
        %330 = vmatpush1.bf16.msra.mxu0 0
        %331 = vmatprep.subr.bf16.mxu0 0
        %332 = vmatpush1.bf16.msra.mxu0 0
        %333 = vmatprep.subr.bf16.mxu0 0
        %334 = vmatpush1.bf16.msra.mxu0 %v314
        %335 = vmatprep.subr.bf16.mxu0 0
        %336 = vmatpush2.bf16.msra.mxu0 0
        %337 = vmatprep.subr.bf16.mxu0 0
        %338 = vmatpush2.bf16.msra.mxu0 0
        %339 = vmatprep.subr.bf16.mxu0 0
        %340 = vmatpush2.bf16.msra.mxu0 0
        %341 = vmatprep.subr.bf16.mxu0 0
        %342 = vmatpush2.bf16.msra.mxu0 0
        %343 = vmatprep.subr.bf16.mxu0 0
        %344 = vmatpush2.bf16.msra.mxu0 0
        %345 = vmatprep.subr.bf16.mxu0 0
        %346 = vmatpush2.bf16.msra.mxu0 0
        %347 = vmatprep.subr.bf16.mxu0 0
        %348 = vmatpush2.bf16.msra.mxu0 0
        %349 = vmatprep.subr.bf16.mxu0 0
        %350 = vmatpush2.bf16.msra.mxu0 0
        %351 = vmatprep.mubr.bf16.mxu0 0
        %352 = vmatmul.mubr.bf16.gmra.mxu0 %v317
        %v353 = vpop.f32.mrf.mxu0
        %v354 = vadd.f32 0.0, %v353
        %v355 = vpop.f32.mrf.mxu0
        %v356 = vpop.f32.mrf.mxu0
        %v357 = vpop.f32.mrf.mxu0
        %358 = vdwg.mxu0
        %v359 = vld [vmem:[#allocation5] sm:$0xff]
        %v360 = vld [vmem:[#allocation5 + $0x8] sm:$0xff]
        %v361 = vld [vmem:[#allocation5 + $0x10] sm:$0xff]
        %v362 = vld [vmem:[#allocation5 + $0x18] sm:$0xff]
        %v363 = vld [vmem:[#allocation5 + $0x20] sm:$0xff]
        %v364 = vld [vmem:[#allocation5 + $0x28] sm:$0xff]
        %v365 = vld [vmem:[#allocation5 + $0x30] sm:$0xff]
        %v366 = vld [vmem:[#allocation5 + $0x38] sm:$0xff]
        %v367 = vld [vmem:[#allocation5 + $0x40] sm:$0xff]
        %v368 = vld [vmem:[#allocation5 + $0x48] sm:$0xff]
        %v369 = vld [vmem:[#allocation5 + $0x50] sm:$0xff]
        %v370 = vld [vmem:[#allocation5 + $0x58] sm:$0xff]
        %v371 = vld [vmem:[#allocation5 + $0x60] sm:$0xff]
        %v372 = vld [vmem:[#allocation5 + $0x68] sm:$0xff]
        %v373 = vld [vmem:[#allocation5 + $0x70] sm:$0xff]
        %v374 = vld [vmem:[#allocation5 + $0x78] sm:$0xff]
        %v375 = vpack.c.bf16 %v354, %v354
        %v376 = vpack.c.bf16 %v360, %v359
        %v377 = vpack.c.bf16 %v362, %v361
        %v378 = vpack.c.bf16 %v364, %v363
        %v379 = vpack.c.bf16 %v366, %v365
        %v380 = vpack.c.bf16 %v368, %v367
        %v381 = vpack.c.bf16 %v370, %v369
        %v382 = vpack.c.bf16 %v372, %v371
        %v383 = vpack.c.bf16 %v374, %v373
        %v384 = vld [vmem:[%s4] sm:$0x1]
        %v386 = vlaneseq
        %v387 = vshrl.u32 %v386, 7
        %v388 = vsub.s32 0, %v387
        %v389 = vrot.slane %v384, %v388
        %391 = vmatprep.subr.bf16.mxu0 0
        %392 = vmatpush1.bf16.msra.mxu0 %v383
        %393 = vmatprep.subr.bf16.mxu0 0
        %394 = vmatpush1.bf16.msra.mxu0 %v382
        %395 = vmatprep.subr.bf16.mxu0 0
        %396 = vmatpush1.bf16.msra.mxu0 %v381
        %397 = vmatprep.subr.bf16.mxu0 0
        %398 = vmatpush1.bf16.msra.mxu0 %v380
        %399 = vmatprep.subr.bf16.mxu0 0
        %400 = vmatpush1.bf16.msra.mxu0 %v379
        %401 = vmatprep.subr.bf16.mxu0 0
        %402 = vmatpush1.bf16.msra.mxu0 %v378
        %403 = vmatprep.subr.bf16.mxu0 0
        %404 = vmatpush1.bf16.msra.mxu0 %v377
        %405 = vmatprep.subr.bf16.mxu0 0
        %406 = vmatpush1.bf16.msra.mxu0 %v376
        %407 = vmatprep.subr.bf16.mxu0 0
        %408 = vmatpush2.bf16.msra.mxu0 0
        %409 = vmatprep.subr.bf16.mxu0 0
        %410 = vmatpush2.bf16.msra.mxu0 0
        %411 = vmatprep.subr.bf16.mxu0 0
        %412 = vmatpush2.bf16.msra.mxu0 0
        %413 = vmatprep.subr.bf16.mxu0 0
        %414 = vmatpush2.bf16.msra.mxu0 0
        %415 = vmatprep.subr.bf16.mxu0 0
        %416 = vmatpush2.bf16.msra.mxu0 0
        %417 = vmatprep.subr.bf16.mxu0 0
        %418 = vmatpush2.bf16.msra.mxu0 0
        %419 = vmatprep.subr.bf16.mxu0 0
        %420 = vmatpush2.bf16.msra.mxu0 0
        %421 = vmatprep.subr.bf16.mxu0 0
        %422 = vmatpush2.bf16.msra.mxu0 0
        %423 = vmatprep.mubr.bf16.mxu0 0
        %424 = vmatmul.mubr.bf16.gmra.mxu0 %v375
        %v425 = vpop.f32.mrf.mxu0
        %v426 = vadd.f32 %v389, %v425
        %v427 = vpop.f32.mrf.mxu0
        %v428 = vpop.f32.mrf.mxu0
        %v429 = vpop.f32.mrf.mxu0
        %430 = vdwg.mxu0
        %v431 = vld [vmem:[#allocation7] sm:$0xff]
        %v432 = vld [vmem:[#allocation7 + $0x8] sm:$0xff]
        %v433 = vld [vmem:[#allocation7 + $0x10] sm:$0xff]
        %v434 = vld [vmem:[#allocation7 + $0x18] sm:$0xff]
        %v435 = vld [vmem:[#allocation7 + $0x20] sm:$0xff]
        %v436 = vld [vmem:[#allocation7 + $0x28] sm:$0xff]
        %v437 = vld [vmem:[#allocation7 + $0x30] sm:$0xff]
        %v438 = vld [vmem:[#allocation7 + $0x38] sm:$0xff]
        %v439 = vld [vmem:[#allocation7 + $0x40] sm:$0xff]
        %v440 = vld [vmem:[#allocation7 + $0x48] sm:$0xff]
        %v441 = vld [vmem:[#allocation7 + $0x50] sm:$0xff]
        %v442 = vld [vmem:[#allocation7 + $0x58] sm:$0xff]
        %v443 = vld [vmem:[#allocation7 + $0x60] sm:$0xff]
        %v444 = vld [vmem:[#allocation7 + $0x68] sm:$0xff]
        %v445 = vld [vmem:[#allocation7 + $0x70] sm:$0xff]
        %v446 = vld [vmem:[#allocation7 + $0x78] sm:$0xff]
        %v447 = vpack.c.bf16 %v311, %v311
        %v448 = vpack.c.bf16 %v432, %v431
        %v449 = vpack.c.bf16 %v434, %v433
        %v450 = vpack.c.bf16 %v436, %v435
        %v451 = vpack.c.bf16 %v438, %v437
        %v452 = vpack.c.bf16 %v440, %v439
        %v453 = vpack.c.bf16 %v442, %v441
        %v454 = vpack.c.bf16 %v444, %v443
        %v455 = vpack.c.bf16 %v446, %v445
        %456 = vmatprep.subr.bf16.mxu0 0
        %457 = vmatpush1.bf16.msra.mxu0 %v455
        %458 = vmatprep.subr.bf16.mxu0 0
        %459 = vmatpush1.bf16.msra.mxu0 %v454
        %460 = vmatprep.subr.bf16.mxu0 0
        %461 = vmatpush1.bf16.msra.mxu0 %v453
        %462 = vmatprep.subr.bf16.mxu0 0
        %463 = vmatpush1.bf16.msra.mxu0 %v452
        %464 = vmatprep.subr.bf16.mxu0 0
        %465 = vmatpush1.bf16.msra.mxu0 %v451
        %466 = vmatprep.subr.bf16.mxu0 0
        %467 = vmatpush1.bf16.msra.mxu0 %v450
        %468 = vmatprep.subr.bf16.mxu0 0
        %469 = vmatpush1.bf16.msra.mxu0 %v449
        %470 = vmatprep.subr.bf16.mxu0 0
        %471 = vmatpush1.bf16.msra.mxu0 %v448
        %472 = vmatprep.subr.bf16.mxu0 0
        %473 = vmatpush2.bf16.msra.mxu0 0
        %474 = vmatprep.subr.bf16.mxu0 0
        %475 = vmatpush2.bf16.msra.mxu0 0
        %476 = vmatprep.subr.bf16.mxu0 0
        %477 = vmatpush2.bf16.msra.mxu0 0
        %478 = vmatprep.subr.bf16.mxu0 0
        %479 = vmatpush2.bf16.msra.mxu0 0
        %480 = vmatprep.subr.bf16.mxu0 0
        %481 = vmatpush2.bf16.msra.mxu0 0
        %482 = vmatprep.subr.bf16.mxu0 0
        %483 = vmatpush2.bf16.msra.mxu0 0
        %484 = vmatprep.subr.bf16.mxu0 0
        %485 = vmatpush2.bf16.msra.mxu0 0
        %486 = vmatprep.subr.bf16.mxu0 0
        %487 = vmatpush2.bf16.msra.mxu0 0
        %488 = vmatprep.mubr.bf16.mxu0 0
        %489 = vmatmul.mubr.bf16.gmra.mxu0 %v447
        %v490 = vpop.f32.mrf.mxu0
        %v491 = vadd.f32 0.0, %v490
        %v492 = vpop.f32.mrf.mxu0
        %v493 = vpop.f32.mrf.mxu0
        %v494 = vpop.f32.mrf.mxu0
        %495 = vdwg.mxu0
        %v496 = vadd.f32 %v426, %v491
        %v497 = vmul.f32 %v496, %v496
        %498 = vadd.xlane.f32.xlu0 %v497
        %v499 = vpop.xlane.xlu0 %498
        %v500 = vmax.f32 %v499, 1e-24
        %v501 = vrsqrt.pop %v500
        %v502 = vmul.f32 %v496, %v501
        %vm503 = vcmp.ge.f32.partialorder %v502, 0.0
        %v504 = vmul.f32 %v502, 0.2
        %v505 = vsel %vm503, %v502, %v504
        %v506 = vld [vmem:[#allocation8] sm:$0xff]
        %v507 = vld [vmem:[%s300] sm:$0xff]
        %v508 = vpack.c.bf16 %v507, %v507
        %v509 = vpack.c.bf16 %v505, %v505
        %510 = vxpose.xlu0.c.b16.start [1/8] %v508, 128
        %511 = vxpose.xlu0.c.b16.cont [2/8] 0, 128
        %512 = vxpose.xlu0.c.b16.cont [3/8] 0, 128
        %513 = vxpose.xlu0.c.b16.cont [4/8] 0, 128
        %514 = vxpose.xlu0.c.b16.cont [5/8] 0, 128
        %515 = vxpose.xlu0.c.b16.cont [6/8] 0, 128
        %516 = vxpose.xlu0.c.b16.cont [7/8] 0, 128
        %517 = vxpose.xlu0.c.b16.end [8/8] 0, 128
        %v518 = vpop.trf.xlu0
        %v519 = vpop.trf.xlu0
        %v520 = vpop.trf.xlu0
        %v521 = vpop.trf.xlu0
        %v522 = vpop.trf.xlu0
        %v523 = vpop.trf.xlu0
        %v524 = vpop.trf.xlu0
        %v525 = vpop.trf.xlu0
        %vm526 = vcmask 64512
        %v528 = vsel %vm526, %v518, 0
        %vm530 = vcmask 1043456
        %v532 = vsel %vm530, %v509, 0
        %534 = vmatprep.subr.bf16.mxu0 0
        %535 = vmatpush1.bf16.msra.mxu0 0
        %536 = vmatprep.subr.bf16.mxu0 0
        %537 = vmatpush1.bf16.msra.mxu0 0
        %538 = vmatprep.subr.bf16.mxu0 0
        %539 = vmatpush1.bf16.msra.mxu0 0
        %540 = vmatprep.subr.bf16.mxu0 0
        %541 = vmatpush1.bf16.msra.mxu0 0
        %542 = vmatprep.subr.bf16.mxu0 0
        %543 = vmatpush1.bf16.msra.mxu0 0
        %544 = vmatprep.subr.bf16.mxu0 0
        %545 = vmatpush1.bf16.msra.mxu0 0
        %546 = vmatprep.subr.bf16.mxu0 0
        %547 = vmatpush1.bf16.msra.mxu0 0
        %548 = vmatprep.subr.bf16.mxu0 0
        %549 = vmatpush1.bf16.msra.mxu0 %v532
        %550 = vmatprep.subr.bf16.mxu0 0
        %551 = vmatpush2.bf16.msra.mxu0 0
        %552 = vmatprep.subr.bf16.mxu0 0
        %553 = vmatpush2.bf16.msra.mxu0 0
        %554 = vmatprep.subr.bf16.mxu0 0
        %555 = vmatpush2.bf16.msra.mxu0 0
        %556 = vmatprep.subr.bf16.mxu0 0
        %557 = vmatpush2.bf16.msra.mxu0 0
        %558 = vmatprep.subr.bf16.mxu0 0
        %559 = vmatpush2.bf16.msra.mxu0 0
        %560 = vmatprep.subr.bf16.mxu0 0
        %561 = vmatpush2.bf16.msra.mxu0 0
        %562 = vmatprep.subr.bf16.mxu0 0
        %563 = vmatpush2.bf16.msra.mxu0 0
        %564 = vmatprep.subr.bf16.mxu0 0
        %565 = vmatpush2.bf16.msra.mxu0 0
        %566 = vmatprep.mubr.bf16.mxu0 0
        %567 = vmatmul.mubr.bf16.gmra.mxu0 %v528
        %v568 = vpop.f32.mrf.mxu0
        %v569 = vadd.f32 0.0, %v568
        %v570 = vpop.f32.mrf.mxu0
        %v571 = vpop.f32.mrf.mxu0
        %v572 = vpop.f32.mrf.mxu0
        %573 = vdwg.mxu0
        %v574 = vadd.f32 %v506, %v569
        %575 = vst [vmem:[#allocation8] sm:$0xff] %v574
        // Predicated region
        $region61: #{tpu_custom_call.1} parent=43 // pred_check
          %p576 = pneg %p171
        $region62: #{tpu_custom_call.1} parent=43 // pred_check_branch
          %578 = sbr.rel (%p576) target = $region64
        $region63: #{tpu_custom_call.1} parent=43 // pred_region
          %s580 = ssub.s32 128, 128
          %581 = vsyncadd [#allocation4], %s580
          %s583 = sshll.u32 [#allocation8], 4
          %s584 = int_to_ptr.vmem [resolvable:$true] %s583
          %586 = dma.vmem_to_hbm [thread:$0]  %s584, 128, %s6, [#allocation4]
        $region64: #{tpu_custom_call.1} parent=43 // pred_fallthru
          _
        // Predicated region
        $region65: #{tpu_custom_call.1} parent=43 // pred_check
          %p587 = pneg %p171
        $region66: #{tpu_custom_call.1} parent=43 // pred_check_branch
          %589 = sbr.rel (%p587) target = $region68
        $region67: #{tpu_custom_call.1} parent=43 // pred_region
          %590 = dma.done [#allocation4], 128
        $region68: #{tpu_custom_call.1} parent=43 // pred_fallthru
          _
      $region44: #{tpu_custom_call.1} parent=5 // pred_fallthru
        _
      %p591 = scmp.le.s32.totalorder 2, %s17
      // Predicated region
      $region69: #{tpu_custom_call.1} parent=5 // pred_check
        %p592 = pneg %p591
      $region70: #{tpu_custom_call.1} parent=5 // pred_check_branch
        %594 = sbr.rel (%p592) target = $region72
      $region71: #{tpu_custom_call.1} parent=5 // pred_region
        %s595 = ssub.s32 %s17, 2
      $region72: #{tpu_custom_call.1} parent=5 // pred_fallthru
        _
    $region6: #{tpu_custom_call.1} parent=1 // loop_footer
      %s21 = sadd.s32 1, %s17
    $region7: #{tpu_custom_call.1} parent=1 // loop_footer_branch
      %16 = sbr.rel target = $region3
    $region8: #{tpu_custom_call.1} parent=1 // loop_exit
      _
    %596 = vsyncpa [#allocation3], 1
    %s597 = scalar_lea.sflag [#allocation3], 1
    %598 = vsyncpa %s597, 1
    %599 = vsyncpa [#allocation6], 1
    %600 = vsyncpa [#allocation4], 1
    %s601 = scalar_lea.sflag [#allocation4], 1
    %602 = vsyncpa %s601, 1

</llo_original>
